<compile_context>
chip_gen: v5e
topology: v5e:2x2
jax: 0.10.0
libtpu: 0.0.40
codegen_flags: <defaults>
</compile_context>

<pallas_src>
import jax
import jax.numpy as jnp
from jax.experimental import pallas as pl
from jax.experimental.pallas import tpu as pltpu


def _round_up(x, m):
    return (x + m - 1) // m * m


# ----------------------------------------------------------------------------
# Fused per-group kernel: mean-pool (XLU) -> Linear -> Linear -> GELU -> Linear
# ----------------------------------------------------------------------------
def _make_group_kernel(inv_hw):
    """inv_hw is a Python float (1/HW for this group) baked in at trace time."""

    def kernel(x_ref,              # VMEM [rows_pad, C_pad, HW_pad]
               wb_ref,             # VMEM [C_pad, D_pad]
               bb_ref,             # VMEM [1, D_pad]
               w1_ref, b1_ref,     # VMEM [D_pad, H_pad], [1, H_pad]
               w2_ref, b2_ref,     # VMEM [H_pad, K_pad], [1, K_pad]
               o_ref):             # VMEM [rows_pad, K_pad]
        # Global average pool: lane-axis sum on the XLU (padded lanes are
        # zero), f32 accumulation, 1/HW scale on the VPU.
        pooled = jnp.sum(x_ref[...].astype(jnp.float32), axis=-1) * inv_hw
        pooled = pooled.astype(wb_ref.dtype)                 # [rows_pad, C_pad]

        # Backbone linear (MXU, f32 accumulate) + bias.
        feats = jnp.dot(pooled, wb_ref[...],
                        preferred_element_type=jnp.float32) + bb_ref[...]

        # Head MLP: Linear -> GELU (tanh approx, EUP) -> Linear.
        h = jnp.dot(feats.astype(w1_ref.dtype), w1_ref[...],
                    preferred_element_type=jnp.float32) + b1_ref[...]
        h = jax.nn.gelu(h)
        o_ref[...] = (jnp.dot(h.astype(w2_ref.dtype), w2_ref[...],
                              preferred_element_type=jnp.float32)
                      + b2_ref[...]).astype(o_ref.dtype)

    return kernel


# ----------------------------------------------------------------------------
# One-time parameter preparation (padding / dtype cast done outside forward)
# ----------------------------------------------------------------------------
def prepare_params(params, compute_dtype=jnp.float32):
    c, d = int(params["w_b"].shape[0]), int(params["w_b"].shape[1])
    h_hid = int(params["w1"].shape[1])
    k = int(params["w2"].shape[1])
    c_pad = _round_up(c, 8)
    d_pad = _round_up(d, 128)
    h_pad = _round_up(h_hid, 128)
    k_pad = _round_up(k, 128)

    def pad2(a, rows, cols, dtype):
        a = jnp.asarray(a, dtype)
        return jnp.pad(a, ((0, rows - a.shape[0]), (0, cols - a.shape[1])))

    return {
        # Matmul operands in compute_dtype (bf16 on v6e/v7x halves DMA,
        # doubles MXU throughput); biases stay f32 (VPU adds in f32).
        "wb": pad2(params["w_b"], c_pad, d_pad, compute_dtype),
        "bb": pad2(params["b_b"], 1, d_pad, jnp.float32),
        "w1": pad2(params["w1"], d_pad, h_pad, compute_dtype),
        "b1": pad2(params["b1"], 1, h_pad, jnp.float32),
        "w2": pad2(params["w2"], h_pad, k_pad, compute_dtype),
        "b2": pad2(params["b2"], 1, k_pad, jnp.float32),
        "dims": dict(c=c, d=d, h=h_hid, k=k,
                     c_pad=c_pad, d_pad=d_pad, h_pad=h_pad, k_pad=k_pad),
        "compute_dtype": compute_dtype,
    }


# ----------------------------------------------------------------------------
# MultiCropWrapper forward
# ----------------------------------------------------------------------------
def multi_crop_forward(crops, prep):
    """crops: list of NCHW arrays (possibly different spatial sizes)."""
    if not isinstance(crops, (list, tuple)):
        crops = [crops]
    crops = list(crops)

    dims = prep["dims"]
    c, k = dims["c"], dims["k"]
    c_pad, d_pad = dims["c_pad"], dims["d_pad"]
    h_pad, k_pad = dims["h_pad"], dims["k_pad"]
    cdt = prep["compute_dtype"]

    assert all(int(x.shape[1]) == c for x in crops), "crops must share channels"

    # torch.unique_consecutive(resolutions, return_counts=True) semantics:
    # group consecutive crops of the same spatial resolution (trace-time glue).
    groups = []
    last_res = None
    for x in crops:
        res = int(x.shape[-1])
        if last_res is None or res != last_res:
            groups.append([])
            last_res = res
        groups[-1].append(x)

    outs = []
    for grp in groups:
        hw = int(grp[0].shape[-2]) * int(grp[0].shape[-1])
        rows = sum(int(x.shape[0]) for x in grp)
        rows_pad = _round_up(rows, 8)
        hw_pad = _round_up(hw, 128)

        # Pack this group: batch-concat, NCHW -> [rows, C, HW], zero-pad to
        # (8,128)-aligned last-two dims.  No padding up to the largest crop.
        x_cat = jnp.concatenate(
            [x.reshape(int(x.shape[0]), c, -1) for x in grp], axis=0)
        x_pad = jnp.pad(
            x_cat.astype(cdt),
            ((0, rows_pad - rows), (0, c_pad - c), (0, hw_pad - hw)))

        itemsize = jnp.dtype(cdt).itemsize
        flops = (2 * rows_pad * (c_pad * d_pad + d_pad * h_pad + h_pad * k_pad)
                 + rows_pad * c_pad * hw_pad)           # pool sum included
        bytes_accessed = int(
            x_pad.size * itemsize
            + (prep["wb"].size + prep["w1"].size + prep["w2"].size) * itemsize
            + (prep["bb"].size + prep["b1"].size + prep["b2"].size) * 4
            + rows_pad * k_pad * 4)
        cost = pl.CostEstimate(flops=flops,
                               transcendentals=rows_pad * h_pad,
                               bytes_accessed=bytes_accessed)

        grid_spec = pltpu.PrefetchScalarGridSpec(
            num_scalar_prefetch=0,
            grid=(1,),
            in_specs=[
                pl.BlockSpec((rows_pad, c_pad, hw_pad), lambda i: (0, 0, 0)),
                pl.BlockSpec((c_pad, d_pad), lambda i: (0, 0)),
                pl.BlockSpec((1, d_pad),     lambda i: (0, 0)),
                pl.BlockSpec((d_pad, h_pad), lambda i: (0, 0)),
                pl.BlockSpec((1, h_pad),     lambda i: (0, 0)),
                pl.BlockSpec((h_pad, k_pad), lambda i: (0, 0)),
                pl.BlockSpec((1, k_pad),     lambda i: (0, 0)),
            ],
            out_specs=pl.BlockSpec((rows_pad, k_pad), lambda i: (0, 0)),
        )

        out_pad = pl.pallas_call(
            _make_group_kernel(1.0 / float(hw)),
            out_shape=jax.ShapeDtypeStruct((rows_pad, k_pad), jnp.float32),
            grid_spec=grid_spec,
            compiler_params=pltpu.CompilerParams(
                dimension_semantics=("arbitrary",)),
            cost_estimate=cost,
        )(x_pad, prep["wb"], prep["bb"], prep["w1"], prep["b1"],
          prep["w2"], prep["b2"])

        # Slice padded rows / lanes back off (tiny output-side glue only).
        outs.append(out_pad[:rows, :k])

    return jnp.concatenate(outs, axis=0) if len(outs) > 1 else outs[0]


# ----------------------------------------------------------------------------
# main
# ----------------------------------------------------------------------------
if __name__ == "__main__":
    key = jax.random.PRNGKey(0)

    # Small DINO-like setup: 2 global crops @ 16x16 and 4 local crops @ 8x8,
    # batch=2 per crop, channels=4, feature dim D=32, head hidden=32, out K=16.
    B, C = 2, 4
    D, H_HID, K = 32, 32, 16

    keys = jax.random.split(key, 12)
    crops = []
    for i in range(2):                                    # global crops (16x16)
        crops.append(jax.random.normal(keys[i], (B, C, 16, 16), jnp.float32))
    for i in range(4):                                    # local crops (8x8)
        crops.append(jax.random.normal(keys[2 + i], (B, C, 8, 8), jnp.float32))

    params = {
        "w_b": jax.random.normal(keys[6], (C, D), jnp.float32) * 0.1,
        "b_b": jax.random.normal(keys[7], (1, D), jnp.float32) * 0.1,
        "w1": jax.random.normal(keys[8], (D, H_HID), jnp.float32) * 0.1,
        "b1": jax.random.normal(keys[9], (1, H_HID), jnp.float32) * 0.1,
        "w2": jax.random.normal(keys[10], (H_HID, K), jnp.float32) * 0.1,
        "b2": jax.random.normal(keys[11], (1, K), jnp.float32) * 0.1,
    }

    # Padded params computed once (not re-materialized per forward).
    # compute_dtype=jnp.bfloat16 is the recommended setting on v6e/v7x; f32 is
    # used here so the tiny demo matches the f32 reference at 1e-4.
    prep = prepare_params(params, compute_dtype=jnp.float32)

    out = multi_crop_forward(crops, prep)
    out = jax.block_until_ready(out)

    # Sanity: output rows = total crops * per-crop batch = 6 * 2 = 12
    assert out.shape == (len(crops) * B, K), out.shape

    # Reference check in plain JAX (same semantics as the torch wrapper).
    def ref_forward(crops, p):
        feats = []
        for x in crops:
            pooled = jnp.mean(x.reshape(x.shape[0], x.shape[1], -1), axis=-1)
            feats.append(pooled @ p["w_b"] + p["b_b"])
        f = jnp.concatenate(feats, axis=0)
        h = jax.nn.gelu(f @ p["w1"] + p["b1"])
        return h @ p["w2"] + p["b2"]

    ref = ref_forward(crops, params)
    assert jnp.allclose(out, ref, atol=1e-4, rtol=1e-4), \
        float(jnp.max(jnp.abs(out - ref)))

    print("KERNEL_OK")
</pallas_src>

<mosaic_0001>
module attributes {stable_mosaic.version = 11 : i64} {
  func.func @kernel(%arg0: i32, %arg1: memref<8x8x256xf32, #tpu.memory_space<vmem>>, %arg2: memref<8x128xf32, #tpu.memory_space<vmem>>, %arg3: memref<1x128xf32, #tpu.memory_space<vmem>>, %arg4: memref<128x128xf32, #tpu.memory_space<vmem>>, %arg5: memref<1x128xf32, #tpu.memory_space<vmem>>, %arg6: memref<128x128xf32, #tpu.memory_space<vmem>>, %arg7: memref<1x128xf32, #tpu.memory_space<vmem>>, %arg8: memref<8x128xf32, #tpu.memory_space<vmem>>) attributes {dimension_semantics = [#tpu.dimension_semantics<arbitrary>], iteration_bounds = array<i64: 1>, scalar_prefetch = 0 : i64, scratch_operands = 0 : i64, tpu.core_type = #tpu.core_type<tc>, window_params = [{pipeline_mode = #tpu.pipeline_mode<synchronous>, transform_indices = @transform_0, window_bounds = array<i64: 8, 8, 256>}, {pipeline_mode = #tpu.pipeline_mode<synchronous>, transform_indices = @transform_1, window_bounds = array<i64: 8, 128>}, {pipeline_mode = #tpu.pipeline_mode<synchronous>, transform_indices = @transform_2, window_bounds = array<i64: 1, 128>}, {pipeline_mode = #tpu.pipeline_mode<synchronous>, transform_indices = @transform_3, window_bounds = array<i64: 128, 128>}, {pipeline_mode = #tpu.pipeline_mode<synchronous>, transform_indices = @transform_4, window_bounds = array<i64: 1, 128>}, {pipeline_mode = #tpu.pipeline_mode<synchronous>, transform_indices = @transform_5, window_bounds = array<i64: 128, 128>}, {pipeline_mode = #tpu.pipeline_mode<synchronous>, transform_indices = @transform_6, window_bounds = array<i64: 1, 128>}, {pipeline_mode = #tpu.pipeline_mode<synchronous>, transform_indices = @transform_7, window_bounds = array<i64: 8, 128>}]} {
    %c0 = arith.constant 0 : index
    %c0_0 = arith.constant 0 : index
    %c0_1 = arith.constant 0 : index
    %0 = vector.load %arg1[%c0, %c0_0, %c0_1] : memref<8x8x256xf32, #tpu.memory_space<vmem>>, vector<8x8x256xf32>
    %cst = arith.constant dense<0.000000e+00> : vector<8x8xf32>
    %1 = vector.multi_reduction <add>, %0, %cst [2] : vector<8x8x256xf32> to vector<8x8xf32>
    %cst_2 = arith.constant 3.906250e-03 : f32
    %2 = vector.broadcast %cst_2 : f32 to vector<8x8xf32>
    %3 = arith.mulf %1, %2 : vector<8x8xf32>
    %c0_3 = arith.constant 0 : index
    %c0_4 = arith.constant 0 : index
    %4 = vector.load %arg2[%c0_3, %c0_4] : memref<8x128xf32, #tpu.memory_space<vmem>>, vector<8x128xf32>
    %cst_5 = arith.constant dense<0.000000e+00> : vector<8x128xf32>
    %5 = tpu.matmul %3, %4, %cst_5 {dimension_numbers = #tpu.dot_dimension_numbers<[1], [0], [0], [1], [0, 0, 1, 1], [], []>} : vector<8x8xf32>, vector<8x128xf32>, vector<8x128xf32> -> vector<8x128xf32>
    %c0_6 = arith.constant 0 : index
    %c0_7 = arith.constant 0 : index
    %6 = vector.load %arg3[%c0_6, %c0_7] : memref<1x128xf32, #tpu.memory_space<vmem>>, vector<1x128xf32>
    %7 = vector.broadcast %6 : vector<1x128xf32> to vector<8x128xf32>
    %8 = arith.addf %5, %7 : vector<8x128xf32>
    %c0_8 = arith.constant 0 : index
    %c0_9 = arith.constant 0 : index
    %9 = vector.load %arg4[%c0_8, %c0_9] : memref<128x128xf32, #tpu.memory_space<vmem>>, vector<128x128xf32>
    %cst_10 = arith.constant dense<0.000000e+00> : vector<8x128xf32>
    %10 = tpu.matmul %8, %9, %cst_10 {dimension_numbers = #tpu.dot_dimension_numbers<[1], [0], [0], [1], [0, 0, 1, 1], [], []>} : vector<8x128xf32>, vector<128x128xf32>, vector<8x128xf32> -> vector<8x128xf32>
    %c0_11 = arith.constant 0 : index
    %c0_12 = arith.constant 0 : index
    %11 = vector.load %arg5[%c0_11, %c0_12] : memref<1x128xf32, #tpu.memory_space<vmem>>, vector<1x128xf32>
    %12 = vector.broadcast %11 : vector<1x128xf32> to vector<8x128xf32>
    %13 = arith.addf %10, %12 : vector<8x128xf32>
    %14 = arith.mulf %13, %13 : vector<8x128xf32>
    %15 = arith.mulf %13, %14 : vector<8x128xf32>
    %cst_13 = arith.constant 4.471500e-02 : f32
    %16 = vector.broadcast %cst_13 : f32 to vector<8x128xf32>
    %17 = arith.mulf %16, %15 : vector<8x128xf32>
    %18 = arith.addf %13, %17 : vector<8x128xf32>
    %cst_14 = arith.constant 0.797884583 : f32
    %19 = vector.broadcast %cst_14 : f32 to vector<8x128xf32>
    %20 = arith.mulf %19, %18 : vector<8x128xf32>
    %21 = math.tanh %20 : vector<8x128xf32>
    %cst_15 = arith.constant 1.000000e+00 : f32
    %22 = vector.broadcast %cst_15 : f32 to vector<8x128xf32>
    %23 = arith.addf %22, %21 : vector<8x128xf32>
    %cst_16 = arith.constant 5.000000e-01 : f32
    %24 = vector.broadcast %cst_16 : f32 to vector<8x128xf32>
    %25 = arith.mulf %24, %23 : vector<8x128xf32>
    %26 = arith.mulf %13, %25 : vector<8x128xf32>
    %c0_17 = arith.constant 0 : index
    %c0_18 = arith.constant 0 : index
    %27 = vector.load %arg6[%c0_17, %c0_18] : memref<128x128xf32, #tpu.memory_space<vmem>>, vector<128x128xf32>
    %cst_19 = arith.constant dense<0.000000e+00> : vector<8x128xf32>
    %28 = tpu.matmul %26, %27, %cst_19 {dimension_numbers = #tpu.dot_dimension_numbers<[1], [0], [0], [1], [0, 0, 1, 1], [], []>} : vector<8x128xf32>, vector<128x128xf32>, vector<8x128xf32> -> vector<8x128xf32>
    %c0_20 = arith.constant 0 : index
    %c0_21 = arith.constant 0 : index
    %29 = vector.load %arg7[%c0_20, %c0_21] : memref<1x128xf32, #tpu.memory_space<vmem>>, vector<1x128xf32>
    %30 = vector.broadcast %29 : vector<1x128xf32> to vector<8x128xf32>
    %31 = arith.addf %28, %30 : vector<8x128xf32>
    %c0_22 = arith.constant 0 : index
    %c0_23 = arith.constant 0 : index
    %32 = vector.load %arg8[%c0_22, %c0_23] : memref<8x128xf32, #tpu.memory_space<vmem>>, vector<8x128xf32>
    tpu.vector_store %arg8[%c0_22, %c0_23], %31 {strides = array<i32>} : memref<8x128xf32, #tpu.memory_space<vmem>>, vector<8x128xf32>,
    return
  }
  func.func @transform_0(%arg0: i32) -> (i32, i32, i32) {
    %c0_i32 = arith.constant 0 : i32
    %c0_i32_0 = arith.constant 0 : i32
    %c0_i32_1 = arith.constant 0 : i32
    %c0_i32_2 = arith.constant 0 : i32
    return %c0_i32, %c0_i32_0, %c0_i32_1 : i32, i32, i32
  }
  func.func @transform_1(%arg0: i32) -> (i32, i32) {
    %c0_i32 = arith.constant 0 : i32
    %c0_i32_0 = arith.constant 0 : i32
    %c0_i32_1 = arith.constant 0 : i32
    return %c0_i32, %c0_i32_0 : i32, i32
  }
  func.func @transform_2(%arg0: i32) -> (i32, i32) {
    %c0_i32 = arith.constant 0 : i32
    %c0_i32_0 = arith.constant 0 : i32
    %c0_i32_1 = arith.constant 0 : i32
    return %c0_i32, %c0_i32_0 : i32, i32
  }
  func.func @transform_3(%arg0: i32) -> (i32, i32) {
    %c0_i32 = arith.constant 0 : i32
    %c0_i32_0 = arith.constant 0 : i32
    %c0_i32_1 = arith.constant 0 : i32
    return %c0_i32, %c0_i32_0 : i32, i32
  }
  func.func @transform_4(%arg0: i32) -> (i32, i32) {
    %c0_i32 = arith.constant 0 : i32
    %c0_i32_0 = arith.constant 0 : i32
    %c0_i32_1 = arith.constant 0 : i32
    return %c0_i32, %c0_i32_0 : i32, i32
  }
  func.func @transform_5(%arg0: i32) -> (i32, i32) {
    %c0_i32 = arith.constant 0 : i32
    %c0_i32_0 = arith.constant 0 : i32
    %c0_i32_1 = arith.constant 0 : i32
    return %c0_i32, %c0_i32_0 : i32, i32
  }
  func.func @transform_6(%arg0: i32) -> (i32, i32) {
    %c0_i32 = arith.constant 0 : i32
    %c0_i32_0 = arith.constant 0 : i32
    %c0_i32_1 = arith.constant 0 : i32
    return %c0_i32, %c0_i32_0 : i32, i32
  }
  func.func @transform_7(%arg0: i32) -> (i32, i32) {
    %c0_i32 = arith.constant 0 : i32
    %c0_i32_0 = arith.constant 0 : i32
    %c0_i32_1 = arith.constant 0 : i32
    return %c0_i32, %c0_i32_0 : i32, i32
  }
}

</mosaic_0001>

<llo_original>
// kernel: tpu_custom_call.1
$region0: #{tpu_custom_call.1}
  #allocation0 [shape = 'u32[]', space=smem, size = 0x4, offset = 0x4, fixed_abs, tag = 'smem constant byte address 0x4 - core index']
  #allocation1 [shape = 'u32[72,128]{1,0:T(1,128)}', space=vmem, size = 0x9000, scoped, tag = 'internal scratch']
  %s0 = inlined_call_operand.hbm [shape: f32[8,8,256], index: 0, kind: input, shape index: {}]
  %s1 = inlined_call_operand.hbm [shape: f32[8,128], index: 1, kind: input, shape index: {}]
  %s2 = inlined_call_operand.vmem [shape: f32[1,128], index: 2, kind: input, shape index: {}]
  %s3 = inlined_call_operand.hbm [shape: f32[128,128], index: 3, kind: input, shape index: {}]
  %s4 = inlined_call_operand.vmem [shape: f32[1,128], index: 4, kind: input, shape index: {}]
  %s5 = inlined_call_operand.hbm [shape: f32[128,128], index: 5, kind: input, shape index: {}]
  %s6 = inlined_call_operand.vmem [shape: f32[1,128], index: 6, kind: input, shape index: {}]
  %s7 = inlined_call_operand.hbm [shape: f32[8,128], index: 7, kind: output, shape index: {}]
  %s8 = sld [smem:[#allocation0]]
  $region54: #{tpu_custom_call.1} parent=0
    _
  %s10 = ssub.s32 1, %s8
  %s11 = scalar_select 0, %s10, %s8
  $region1: #{tpu_custom_call.1} parent=0
    #allocation2 [shape = 'u8[65536]{0}', space=vmem, size = 0x10000, scoped, tag = 'input window, operand 0, single buffered']
    #allocation3 [shape = 's32[1]{0}', space=sflag, size = 0x4, scoped, tag = 'scoped memory for tpu_custom_call.1']
    #allocation4 [shape = 's32[1]{0}', space=sflag, size = 0x4, scoped, tag = 'scoped memory for tpu_custom_call.1']
    #allocation5 [shape = 'u8[4096]{0}', space=vmem, size = 0x1000, scoped, tag = 'input window, operand 1, single buffered']
    #allocation6 [shape = 's32[1]{0}', space=sflag, size = 0x4, scoped, tag = 'scoped memory for tpu_custom_call.1']
    #allocation7 [shape = 'u8[65536]{0}', space=vmem, size = 0x10000, scoped, tag = 'input window, operand 3, single buffered']
    #allocation8 [shape = 'u8[65536]{0}', space=vmem, size = 0x10000, scoped, tag = 'input window, operand 5, single buffered']
    #allocation9 [shape = 's32[1]{0}', space=sflag, size = 0x4, scoped, tag = 'scoped memory for tpu_custom_call.1']
    #allocation10 [shape = 'u8[4096]{0}', space=vmem, size = 0x1000, scoped, tag = 'output window, operand 0, single buffered']
    %12 = vsyncpa [#allocation3], 0
    %13 = vsyncpa [#allocation6], 0
    %14 = vsyncpa [#allocation9], 0
    %15 = vsyncpa [#allocation4], 0
    // Predicated region
    $region2: #{tpu_custom_call.1} parent=1 // pred_check
      _
    $region3: #{tpu_custom_call.1} parent=1 // pred_check_branch
      %17 = sbr.rel (0) target = $region5
    $region4: #{tpu_custom_call.1} parent=1 // pred_region
      %19 = vsyncadd [#allocation3], 0
      %s20 = sshll.u32 %s0, 4
      %s21 = int_to_ptr.hbm [resolvable:$true] %s20
      %s22 = sshll.u32 [#allocation2], 4
      %s23 = int_to_ptr.vmem [resolvable:$true] %s22
      %28 = dma.hbm_to_vmem [thread:$0]  %s21, 2048, %s23, [#allocation3], 256, 256, 16
    $region5: #{tpu_custom_call.1} parent=1 // pred_fallthru
      _
    // Predicated region
    $region6: #{tpu_custom_call.1} parent=1 // pred_check
      _
    $region7: #{tpu_custom_call.1} parent=1 // pred_check_branch
      %30 = sbr.rel (0) target = $region9
    $region8: #{tpu_custom_call.1} parent=1 // pred_region
      %32 = vsyncadd [#allocation6], 0
      %s34 = sshll.u32 %s1, 4
      %s35 = int_to_ptr.hbm [resolvable:$true] %s34
      %s36 = sshll.u32 [#allocation5], 4
      %s37 = int_to_ptr.vmem [resolvable:$true] %s36
      %39 = dma.hbm_to_vmem [thread:$0]  %s35, 128, %s37, [#allocation6]
    $region9: #{tpu_custom_call.1} parent=1 // pred_fallthru
      _
    // Predicated region
    $region10: #{tpu_custom_call.1} parent=1 // pred_check
      _
    $region11: #{tpu_custom_call.1} parent=1 // pred_check_branch
      %41 = sbr.rel (0) target = $region13
    $region12: #{tpu_custom_call.1} parent=1 // pred_region
      _
    $region13: #{tpu_custom_call.1} parent=1 // pred_fallthru
      _
    // Predicated region
    $region14: #{tpu_custom_call.1} parent=1 // pred_check
      _
    $region15: #{tpu_custom_call.1} parent=1 // pred_check_branch
      %43 = sbr.rel (0) target = $region17
    $region16: #{tpu_custom_call.1} parent=1 // pred_region
      %45 = vsyncadd [#allocation6], 0
      %s46 = sshll.u32 %s3, 4
      %s47 = int_to_ptr.hbm [resolvable:$true] %s46
      %s48 = sshll.u32 [#allocation7], 4
      %s49 = int_to_ptr.vmem [resolvable:$true] %s48
      %54 = dma.hbm_to_vmem [thread:$0]  %s47, 2048, %s49, [#allocation6], 128, 128, 8
    $region17: #{tpu_custom_call.1} parent=1 // pred_fallthru
      _
    // Predicated region
    $region18: #{tpu_custom_call.1} parent=1 // pred_check
      _
    $region19: #{tpu_custom_call.1} parent=1 // pred_check_branch
      %56 = sbr.rel (0) target = $region21
    $region20: #{tpu_custom_call.1} parent=1 // pred_region
      _
    $region21: #{tpu_custom_call.1} parent=1 // pred_fallthru
      _
    // Predicated region
    $region22: #{tpu_custom_call.1} parent=1 // pred_check
      _
    $region23: #{tpu_custom_call.1} parent=1 // pred_check_branch
      %58 = sbr.rel (0) target = $region25
    $region24: #{tpu_custom_call.1} parent=1 // pred_region
      %60 = vsyncadd [#allocation9], 0
      %s61 = sshll.u32 %s5, 4
      %s62 = int_to_ptr.hbm [resolvable:$true] %s61
      %s63 = sshll.u32 [#allocation8], 4
      %s64 = int_to_ptr.vmem [resolvable:$true] %s63
      %69 = dma.hbm_to_vmem [thread:$0]  %s62, 2048, %s64, [#allocation9], 128, 128, 8
    $region25: #{tpu_custom_call.1} parent=1 // pred_fallthru
      _
    // Predicated region
    $region26: #{tpu_custom_call.1} parent=1 // pred_check
      _
    $region27: #{tpu_custom_call.1} parent=1 // pred_check_branch
      %71 = sbr.rel (0) target = $region29
    $region28: #{tpu_custom_call.1} parent=1 // pred_region
      _
    $region29: #{tpu_custom_call.1} parent=1 // pred_fallthru
      _
    // Predicated region
    $region30: #{tpu_custom_call.1} parent=1 // pred_check
      _
    $region31: #{tpu_custom_call.1} parent=1 // pred_check_branch
      %73 = sbr.rel (0) target = $region33
    $region32: #{tpu_custom_call.1} parent=1 // pred_region
      %75 = dma.done [#allocation3], 2048
    $region33: #{tpu_custom_call.1} parent=1 // pred_fallthru
      _
    // Predicated region
    $region34: #{tpu_custom_call.1} parent=1 // pred_check
      _
    $region35: #{tpu_custom_call.1} parent=1 // pred_check_branch
      %77 = sbr.rel (0) target = $region37
    $region36: #{tpu_custom_call.1} parent=1 // pred_region
      %79 = dma.done [#allocation6], 128
    $region37: #{tpu_custom_call.1} parent=1 // pred_fallthru
      _
    // Predicated region
    $region38: #{tpu_custom_call.1} parent=1 // pred_check
      _
    $region39: #{tpu_custom_call.1} parent=1 // pred_check_branch
      %81 = sbr.rel (0) target = $region41
    $region40: #{tpu_custom_call.1} parent=1 // pred_region
      %83 = dma.done [#allocation6], 2048
    $region41: #{tpu_custom_call.1} parent=1 // pred_fallthru
      _
    // Predicated region
    $region42: #{tpu_custom_call.1} parent=1 // pred_check
      _
    $region43: #{tpu_custom_call.1} parent=1 // pred_check_branch
      %85 = sbr.rel (0) target = $region45
    $region44: #{tpu_custom_call.1} parent=1 // pred_region
      %87 = dma.done [#allocation9], 2048
    $region45: #{tpu_custom_call.1} parent=1 // pred_fallthru
      _
    %v88 = vld [vmem:[#allocation2] sm:$0xff]
    %v89 = vld [vmem:[#allocation2 + $0x8] sm:$0xff]
    %v90 = vld [vmem:[#allocation2 + $0x10] sm:$0xff]
    %v91 = vld [vmem:[#allocation2 + $0x18] sm:$0xff]
    %v92 = vld [vmem:[#allocation2 + $0x20] sm:$0xff]
    %v93 = vld [vmem:[#allocation2 + $0x28] sm:$0xff]
    %v94 = vld [vmem:[#allocation2 + $0x30] sm:$0xff]
    %v95 = vld [vmem:[#allocation2 + $0x38] sm:$0xff]
    %v96 = vld [vmem:[#allocation2 + $0x40] sm:$0xff]
    %v97 = vld [vmem:[#allocation2 + $0x48] sm:$0xff]
    %v98 = vld [vmem:[#allocation2 + $0x50] sm:$0xff]
    %v99 = vld [vmem:[#allocation2 + $0x58] sm:$0xff]
    %v100 = vld [vmem:[#allocation2 + $0x60] sm:$0xff]
    %v101 = vld [vmem:[#allocation2 + $0x68] sm:$0xff]
    %v102 = vld [vmem:[#allocation2 + $0x70] sm:$0xff]
    %v103 = vld [vmem:[#allocation2 + $0x78] sm:$0xff]
    %v104 = vadd.f32 %v88, %v89
    %105 = vadd.xlane.f32.xlu0 %v104
    %v106 = vpop.xlane.xlu0 %105
    %v107 = vadd.f32 %v90, %v91
    %108 = vadd.xlane.f32.xlu0 %v107
    %v109 = vpop.xlane.xlu0 %108
    %v110 = vadd.f32 %v92, %v93
    %111 = vadd.xlane.f32.xlu0 %v110
    %v112 = vpop.xlane.xlu0 %111
    %v113 = vadd.f32 %v94, %v95
    %114 = vadd.xlane.f32.xlu0 %v113
    %v115 = vpop.xlane.xlu0 %114
    %v116 = vadd.f32 %v96, %v97
    %117 = vadd.xlane.f32.xlu0 %v116
    %v118 = vpop.xlane.xlu0 %117
    %v119 = vadd.f32 %v98, %v99
    %120 = vadd.xlane.f32.xlu0 %v119
    %v121 = vpop.xlane.xlu0 %120
    %v122 = vadd.f32 %v100, %v101
    %123 = vadd.xlane.f32.xlu0 %v122
    %v124 = vpop.xlane.xlu0 %123
    %v125 = vadd.f32 %v102, %v103
    %126 = vadd.xlane.f32.xlu0 %v125
    %v127 = vpop.xlane.xlu0 %126
    %v128 = vmul.f32 %v106, 0.00390625
    %v129 = vmul.f32 %v109, 0.00390625
    %v130 = vmul.f32 %v112, 0.00390625
    %v131 = vmul.f32 %v115, 0.00390625
    %v132 = vmul.f32 %v118, 0.00390625
    %v133 = vmul.f32 %v121, 0.00390625
    %v134 = vmul.f32 %v124, 0.00390625
    %v135 = vmul.f32 %v127, 0.00390625
    %v136 = vld [vmem:[#allocation5] sm:$0xff]
    %v137 = vld [vmem:[%s2] sm:$0x1]
    %v139 = vperm.slane %v137, 0
    %v149 = vlaneseq
    %v150 = vand.u32 %v149, 127
    %v151 = vperm.slane %v128, %v150
    %v152 = vperm.slane %v129, %v150
    %v153 = vperm.slane %v130, %v150
    %v154 = vperm.slane %v131, %v150
    %v155 = vperm.slane %v132, %v150
    %v156 = vperm.slane %v133, %v150
    %v157 = vperm.slane %v134, %v150
    %v158 = vperm.slane %v135, %v150
    %vm159 = vcmask 1041409
    %v160 = vsel %vm159, %v152, %v151
    %vm161 = vcmask 1042434
    %v162 = vsel %vm161, %v153, %v160
    %vm163 = vcmask 1043459
    %v164 = vsel %vm163, %v154, %v162
    %vm165 = vcmask 1044484
    %v166 = vsel %vm165, %v155, %v164
    %vm167 = vcmask 1045509
    %v168 = vsel %vm167, %v156, %v166
    %vm169 = vcmask 1046534
    %v170 = vsel %vm169, %v157, %v168
    %vm171 = vcmask 1047559
    %v172 = vsel %vm171, %v158, %v170
    %vm173 = vcmask 64512
    %v174 = vsel %vm173, %v172, 0
    %176 = vmatpush.msra.mxu0 0.0
    %177 = vmatpush.msra.mxu0 0.0
    %178 = vmatpush.msra.mxu0 0.0
    %179 = vmatpush.msra.mxu0 0.0
    %180 = vmatpush.msra.mxu0 0.0
    %181 = vmatpush.msra.mxu0 0.0
    %182 = vmatpush.msra.mxu0 0.0
    %183 = vmatpush.msra.mxu0 0.0
    %184 = vmatpush.msra.mxu0 0.0
    %185 = vmatpush.msra.mxu0 0.0
    %186 = vmatpush.msra.mxu0 0.0
    %187 = vmatpush.msra.mxu0 0.0
    %188 = vmatpush.msra.mxu0 0.0
    %189 = vmatpush.msra.mxu0 0.0
    %190 = vmatpush.msra.mxu0 0.0
    %191 = vmatpush.msra.mxu0 %v136
    %192 = vmatmul.f32.gmra.mxu0 %v174
    %v193 = vpop.f32.mrf.mxu0
    %v194 = vadd.f32 %v139, %v193
    %195 = vdwg.mxu0
    %v196 = vld [vmem:[#allocation7] sm:$0xff]
    %v197 = vld [vmem:[#allocation7 + $0x8] sm:$0xff]
    %v198 = vld [vmem:[#allocation7 + $0x10] sm:$0xff]
    %v199 = vld [vmem:[#allocation7 + $0x18] sm:$0xff]
    %v200 = vld [vmem:[#allocation7 + $0x20] sm:$0xff]
    %v201 = vld [vmem:[#allocation7 + $0x28] sm:$0xff]
    %v202 = vld [vmem:[#allocation7 + $0x30] sm:$0xff]
    %v203 = vld [vmem:[#allocation7 + $0x38] sm:$0xff]
    %v204 = vld [vmem:[#allocation7 + $0x40] sm:$0xff]
    %v205 = vld [vmem:[#allocation7 + $0x48] sm:$0xff]
    %v206 = vld [vmem:[#allocation7 + $0x50] sm:$0xff]
    %v207 = vld [vmem:[#allocation7 + $0x58] sm:$0xff]
    %v208 = vld [vmem:[#allocation7 + $0x60] sm:$0xff]
    %v209 = vld [vmem:[#allocation7 + $0x68] sm:$0xff]
    %v210 = vld [vmem:[#allocation7 + $0x70] sm:$0xff]
    %v211 = vld [vmem:[#allocation7 + $0x78] sm:$0xff]
    %v212 = vld [vmem:[%s4] sm:$0x1]
    %v214 = vperm.slane %v212, 0
    %216 = vmatpush.msra.mxu0 %v211
    %217 = vmatpush.msra.mxu0 %v210
    %218 = vmatpush.msra.mxu0 %v209
    %219 = vmatpush.msra.mxu0 %v208
    %220 = vmatpush.msra.mxu0 %v207
    %221 = vmatpush.msra.mxu0 %v206
    %222 = vmatpush.msra.mxu0 %v205
    %223 = vmatpush.msra.mxu0 %v204
    %224 = vmatpush.msra.mxu0 %v203
    %225 = vmatpush.msra.mxu0 %v202
    %226 = vmatpush.msra.mxu0 %v201
    %227 = vmatpush.msra.mxu0 %v200
    %228 = vmatpush.msra.mxu0 %v199
    %229 = vmatpush.msra.mxu0 %v198
    %230 = vmatpush.msra.mxu0 %v197
    %231 = vmatpush.msra.mxu0 %v196
    %232 = vmatmul.f32.gmra.mxu0 %v194
    %v233 = vpop.f32.mrf.mxu0
    %v234 = vadd.f32 %v214, %v233
    %235 = vdwg.mxu0
    %v236 = vmul.f32 %v234, %v234
    %v237 = vmul.f32 %v234, %v236
    %v238 = vmul.f32 %v237, 0.044715
    %v239 = vadd.f32 %v234, %v238
    %v240 = vmul.f32 %v239, 0.7978846
    %v241 = vtanh.pop %v240
    %v242 = vadd.f32 %v241, 1.0
    %v243 = vmul.f32 %v242, 0.5
    %v244 = vmul.f32 %v234, %v243
    %v245 = vld [vmem:[#allocation8] sm:$0xff]
    %v246 = vld [vmem:[#allocation8 + $0x8] sm:$0xff]
    %v247 = vld [vmem:[#allocation8 + $0x10] sm:$0xff]
    %v248 = vld [vmem:[#allocation8 + $0x18] sm:$0xff]
    %v249 = vld [vmem:[#allocation8 + $0x20] sm:$0xff]
    %v250 = vld [vmem:[#allocation8 + $0x28] sm:$0xff]
    %v251 = vld [vmem:[#allocation8 + $0x30] sm:$0xff]
    %v252 = vld [vmem:[#allocation8 + $0x38] sm:$0xff]
    %v253 = vld [vmem:[#allocation8 + $0x40] sm:$0xff]
    %v254 = vld [vmem:[#allocation8 + $0x48] sm:$0xff]
    %v255 = vld [vmem:[#allocation8 + $0x50] sm:$0xff]
    %v256 = vld [vmem:[#allocation8 + $0x58] sm:$0xff]
    %v257 = vld [vmem:[#allocation8 + $0x60] sm:$0xff]
    %v258 = vld [vmem:[#allocation8 + $0x68] sm:$0xff]
    %v259 = vld [vmem:[#allocation8 + $0x70] sm:$0xff]
    %v260 = vld [vmem:[#allocation8 + $0x78] sm:$0xff]
    %v261 = vld [vmem:[%s6] sm:$0x1]
    %v263 = vperm.slane %v261, 0
    %265 = vmatpush.msra.mxu0 %v260
    %266 = vmatpush.msra.mxu0 %v259
    %267 = vmatpush.msra.mxu0 %v258
    %268 = vmatpush.msra.mxu0 %v257
    %269 = vmatpush.msra.mxu0 %v256
    %270 = vmatpush.msra.mxu0 %v255
    %271 = vmatpush.msra.mxu0 %v254
    %272 = vmatpush.msra.mxu0 %v253
    %273 = vmatpush.msra.mxu0 %v252
    %274 = vmatpush.msra.mxu0 %v251
    %275 = vmatpush.msra.mxu0 %v250
    %276 = vmatpush.msra.mxu0 %v249
    %277 = vmatpush.msra.mxu0 %v248
    %278 = vmatpush.msra.mxu0 %v247
    %279 = vmatpush.msra.mxu0 %v246
    %280 = vmatpush.msra.mxu0 %v245
    %281 = vmatmul.f32.gmra.mxu0 %v244
    %v282 = vpop.f32.mrf.mxu0
    %v283 = vadd.f32 %v263, %v282
    %284 = vdwg.mxu0
    %285 = vst [vmem:[#allocation10] sm:$0xff] %v283
    // Predicated region
    $region46: #{tpu_custom_call.1} parent=1 // pred_check
      _
    $region47: #{tpu_custom_call.1} parent=1 // pred_check_branch
      %287 = sbr.rel (0) target = $region49
    $region48: #{tpu_custom_call.1} parent=1 // pred_region
      %289 = vsyncadd [#allocation4], 0
      %s291 = sshll.u32 [#allocation10], 4
      %s292 = int_to_ptr.vmem [resolvable:$true] %s291
      %s293 = sshll.u32 %s7, 4
      %s294 = int_to_ptr.hbm [resolvable:$true] %s293
      %296 = dma.vmem_to_hbm [thread:$0]  %s292, 128, %s294, [#allocation4]
    $region49: #{tpu_custom_call.1} parent=1 // pred_fallthru
      _
    // Predicated region
    $region50: #{tpu_custom_call.1} parent=1 // pred_check
      _
    $region51: #{tpu_custom_call.1} parent=1 // pred_check_branch
      %298 = sbr.rel (0) target = $region53
    $region52: #{tpu_custom_call.1} parent=1 // pred_region
      %300 = dma.done [#allocation4], 128
    $region53: #{tpu_custom_call.1} parent=1 // pred_fallthru
      _
    %301 = vsyncpa [#allocation3], 1
    %302 = vsyncpa [#allocation6], 1
    %303 = vsyncpa [#allocation9], 1
    %304 = vsyncpa [#allocation4], 1

</llo_original>
